<compile_context>
chip_gen: v6e
topology: v6e:2x2x1
jax: 0.10.0
libtpu: 0.0.40
codegen_flags: <defaults>
</compile_context>

<pallas_src>
import jax
import jax.numpy as jnp
from jax.experimental import pallas as pl
from jax.experimental.pallas import tpu as pltpu

LANE = 128  # padded width for every feature dimension (lane-dense everywhere)


def mlp_kernel(x_ref, w_ref, b_ref, o_ref):
    # x_ref: (TB, 128) f32   w_ref: (4, 128, 128) bf16   b_ref: (4, 128) f32
    b = b_ref[...]            # (4, 128) f32, VMEM-resident
    x = x_ref[...]            # (TB, 128) f32

    # Layer 1: Linear(input, 32) + ReLU   (all dims zero-padded to 128)
    h = jnp.dot(x.astype(jnp.bfloat16), w_ref[0],
                preferred_element_type=jnp.float32) + b[0:1, :]
    h = jnp.maximum(h, 0.0)
    # Layer 2: Linear(32, 128) + ReLU
    h = jnp.dot(h.astype(jnp.bfloat16), w_ref[1],
                preferred_element_type=jnp.float32) + b[1:2, :]
    h = jnp.maximum(h, 0.0)
    # Layer 3: Linear(128, 64) + ReLU
    h = jnp.dot(h.astype(jnp.bfloat16), w_ref[2],
                preferred_element_type=jnp.float32) + b[2:3, :]
    h = jnp.maximum(h, 0.0)
    # Layer 4: Linear(64, output) (no activation)
    out = jnp.dot(h.astype(jnp.bfloat16), w_ref[3],
                  preferred_element_type=jnp.float32) + b[3:4, :]
    o_ref[...] = out.astype(o_ref.dtype)


def init_params(key, input_size, output_size):
    """Deterministic init mirroring the nn.Sequential layer shapes.
    PyTorch Linear weight is (out, in); we store the transpose (in, out)."""
    dims = [(input_size, 32), (32, 128), (128, 64), (64, output_size)]
    params = {}
    for i, (d_in, d_out) in enumerate(dims, start=1):
        key, kw, kb = jax.random.split(key, 3)
        bound = 1.0 / (d_in ** 0.5)  # same scale as PyTorch's default uniform init
        params[f"w{i}"] = jax.random.uniform(kw, (d_in, d_out), jnp.float32, -bound, bound)
        params[f"b{i}"] = jax.random.uniform(kb, (1, d_out), jnp.float32, -bound, bound)
    return params


def pack_params(params):
    """Zero-pad every layer to 128x128 / 128 and pack into two slabs.
    Exact: padded weight rows multiply zero-padded activation columns, padded output
    columns are 0*W + 0 bias (-> 0 through ReLU) and the final extras are sliced off."""
    ws, bs = [], []
    for i in range(1, 5):
        w = params[f"w{i}"]                 # (d_in, d_out) f32, already (in, out)
        bvec = params[f"b{i}"].reshape(-1)  # (d_out,) f32
        d_in, d_out = w.shape
        assert d_in <= LANE and d_out <= LANE, "packing assumes dims <= 128"
        ws.append(jnp.zeros((LANE, LANE), jnp.float32).at[:d_in, :d_out].set(w))
        bs.append(jnp.zeros((LANE,), jnp.float32).at[:d_out].set(bvec))
    w_slab = jnp.stack(ws).astype(jnp.bfloat16)   # (4, 128, 128) bf16 MXU operands
    b_slab = jnp.stack(bs)                        # (4, 128) f32
    return w_slab, b_slab


def mlp_forward(x, w_slab, b_slab, out_dim, *, block_rows=512):
    """x: (batch, input_size) f32. Returns (batch, out_dim) f32."""
    batch, in_dim = x.shape
    assert in_dim <= LANE

    # Batch tile: multiple of 8 sublanes, capped at block_rows; tiny demo batches use
    # a single grid step. At block_rows=512 the live VMEM state (double-buffered x and
    # out tiles + resident weights + f32 intermediates) is ~1.5 MiB, far under even
    # v7x's 32 MiB scoped-VMEM default, so one config is portable across v5e/v6e/v7x.
    tb = min(block_rows, max(8, ((batch + 7) // 8) * 8))
    num_blocks = pl.cdiv(batch, tb)
    padded_batch = num_blocks * tb

    x_pad = jnp.zeros((padded_batch, LANE), jnp.float32).at[:batch, :in_dim].set(x)

    out_padded = pl.pallas_call(
        mlp_kernel,
        out_shape=jax.ShapeDtypeStruct((padded_batch, LANE), jnp.float32),
        grid=(num_blocks,),
        in_specs=[
            pl.BlockSpec((tb, LANE), lambda i: (i, 0)),           # x: streamed per step
            pl.BlockSpec((4, LANE, LANE), lambda i: (0, 0, 0)),   # weights: resident
            pl.BlockSpec((4, LANE), lambda i: (0, 0)),            # biases: resident
        ],
        out_specs=pl.BlockSpec((tb, LANE), lambda i: (i, 0)),     # lane-dense store
        compiler_params=pltpu.CompilerParams(
            dimension_semantics=("parallel",)),  # v7x: shard batch tiles over both TCs
    )(x_pad, w_slab, b_slab)

    return out_padded[:batch, :out_dim]


if __name__ == "__main__":
    key = jax.random.PRNGKey(0)
    batch, input_size, output_size = 8, 16, 8

    key, kx, kp = jax.random.split(key, 3)
    x = jax.random.normal(kx, (batch, input_size), dtype=jnp.float32)
    params = init_params(kp, input_size, output_size)
    w_slab, b_slab = pack_params(params)

    out = mlp_forward(x, w_slab, b_slab, output_size)
    jax.block_until_ready(out)

    # Reference 1: identical bf16-operand / f32-accumulate math in plain JAX (tight tol).
    ref = x
    for i in range(1, 5):
        ref = jnp.dot(ref.astype(jnp.bfloat16), params[f"w{i}"].astype(jnp.bfloat16),
                      preferred_element_type=jnp.float32) + params[f"b{i}"]
        if i < 4:
            ref = jnp.maximum(ref, 0.0)

    # Reference 2: pure f32 forward (module semantics) — loose tol for bf16 operands.
    ref32 = x
    for i in range(1, 5):
        ref32 = ref32 @ params[f"w{i}"] + params[f"b{i}"]
        if i < 4:
            ref32 = jnp.maximum(ref32, 0.0)

    assert out.shape == (batch, output_size)
    assert jnp.allclose(out, ref, atol=1e-4, rtol=1e-4), float(jnp.max(jnp.abs(out - ref)))
    assert jnp.allclose(out, ref32, atol=5e-2, rtol=5e-2), float(jnp.max(jnp.abs(out - ref32)))

    print("KERNEL_OK")
</pallas_src>

<mosaic_0001>
module attributes {stable_mosaic.version = 11 : i64} {
  func.func @mlp_kernel(%arg0: i32, %arg1: memref<8x128xf32, #tpu.memory_space<vmem>>, %arg2: memref<4x128x128xbf16, #tpu.memory_space<vmem>>, %arg3: memref<4x128xf32, #tpu.memory_space<vmem>>, %arg4: memref<8x128xf32, #tpu.memory_space<vmem>>) attributes {dimension_semantics = [#tpu.dimension_semantics<parallel>], iteration_bounds = array<i64: 1>, scalar_prefetch = 0 : i64, scratch_operands = 0 : i64, tpu.core_type = #tpu.core_type<tc>, window_params = [{transform_indices = @transform_0, window_bounds = array<i64: 8, 128>}, {pipeline_mode = #tpu.pipeline_mode<synchronous>, transform_indices = @transform_1, window_bounds = array<i64: 4, 128, 128>}, {pipeline_mode = #tpu.pipeline_mode<synchronous>, transform_indices = @transform_2, window_bounds = array<i64: 4, 128>}, {transform_indices = @transform_3, window_bounds = array<i64: 8, 128>}]} {
    %c0 = arith.constant 0 : index
    %c0_0 = arith.constant 0 : index
    %0 = vector.load %arg3[%c0, %c0_0] : memref<4x128xf32, #tpu.memory_space<vmem>>, vector<4x128xf32>
    %c0_1 = arith.constant 0 : index
    %c0_2 = arith.constant 0 : index
    %1 = vector.load %arg1[%c0_1, %c0_2] : memref<8x128xf32, #tpu.memory_space<vmem>>, vector<8x128xf32>
    %2 = arith.truncf %1 : vector<8x128xf32> to vector<8x128xbf16>
    %c0_3 = arith.constant 0 : index
    %c0_4 = arith.constant 0 : index
    %c0_5 = arith.constant 0 : index
    %3 = vector.load %arg2[%c0_3, %c0_4, %c0_5] : memref<4x128x128xbf16, #tpu.memory_space<vmem>>, vector<1x128x128xbf16>
    %4 = vector.shape_cast %3 : vector<1x128x128xbf16> to vector<128x128xbf16>
    %cst = arith.constant dense<0.000000e+00> : vector<8x128xf32>
    %5 = tpu.matmul %2, %4, %cst {dimension_numbers = #tpu.dot_dimension_numbers<[1], [0], [0], [1], [0, 0, 1, 1], [], []>} : vector<8x128xbf16>, vector<128x128xbf16>, vector<8x128xf32> -> vector<8x128xf32>
    %6 = vector.extract_strided_slice %0 {offsets = [0, 0], sizes = [1, 128], strides = [1, 1]} : vector<4x128xf32> to vector<1x128xf32>
    %7 = vector.broadcast %6 : vector<1x128xf32> to vector<8x128xf32>
    %8 = arith.addf %5, %7 : vector<8x128xf32>
    %cst_6 = arith.constant 0.000000e+00 : f32
    %9 = vector.broadcast %cst_6 : f32 to vector<8x128xf32>
    %10 = arith.maximumf %8, %9 : vector<8x128xf32>
    %11 = arith.truncf %10 : vector<8x128xf32> to vector<8x128xbf16>
    %c1 = arith.constant 1 : index
    %c0_7 = arith.constant 0 : index
    %c0_8 = arith.constant 0 : index
    %12 = vector.load %arg2[%c1, %c0_7, %c0_8] : memref<4x128x128xbf16, #tpu.memory_space<vmem>>, vector<1x128x128xbf16>
    %13 = vector.shape_cast %12 : vector<1x128x128xbf16> to vector<128x128xbf16>
    %cst_9 = arith.constant dense<0.000000e+00> : vector<8x128xf32>
    %14 = tpu.matmul %11, %13, %cst_9 {dimension_numbers = #tpu.dot_dimension_numbers<[1], [0], [0], [1], [0, 0, 1, 1], [], []>} : vector<8x128xbf16>, vector<128x128xbf16>, vector<8x128xf32> -> vector<8x128xf32>
    %15 = vector.extract_strided_slice %0 {offsets = [1, 0], sizes = [1, 128], strides = [1, 1]} : vector<4x128xf32> to vector<1x128xf32>
    %16 = vector.broadcast %15 : vector<1x128xf32> to vector<8x128xf32>
    %17 = arith.addf %14, %16 : vector<8x128xf32>
    %cst_10 = arith.constant 0.000000e+00 : f32
    %18 = vector.broadcast %cst_10 : f32 to vector<8x128xf32>
    %19 = arith.maximumf %17, %18 : vector<8x128xf32>
    %20 = arith.truncf %19 : vector<8x128xf32> to vector<8x128xbf16>
    %c2 = arith.constant 2 : index
    %c0_11 = arith.constant 0 : index
    %c0_12 = arith.constant 0 : index
    %21 = vector.load %arg2[%c2, %c0_11, %c0_12] : memref<4x128x128xbf16, #tpu.memory_space<vmem>>, vector<1x128x128xbf16>
    %22 = vector.shape_cast %21 : vector<1x128x128xbf16> to vector<128x128xbf16>
    %cst_13 = arith.constant dense<0.000000e+00> : vector<8x128xf32>
    %23 = tpu.matmul %20, %22, %cst_13 {dimension_numbers = #tpu.dot_dimension_numbers<[1], [0], [0], [1], [0, 0, 1, 1], [], []>} : vector<8x128xbf16>, vector<128x128xbf16>, vector<8x128xf32> -> vector<8x128xf32>
    %24 = vector.extract_strided_slice %0 {offsets = [2, 0], sizes = [1, 128], strides = [1, 1]} : vector<4x128xf32> to vector<1x128xf32>
    %25 = vector.broadcast %24 : vector<1x128xf32> to vector<8x128xf32>
    %26 = arith.addf %23, %25 : vector<8x128xf32>
    %cst_14 = arith.constant 0.000000e+00 : f32
    %27 = vector.broadcast %cst_14 : f32 to vector<8x128xf32>
    %28 = arith.maximumf %26, %27 : vector<8x128xf32>
    %29 = arith.truncf %28 : vector<8x128xf32> to vector<8x128xbf16>
    %c3 = arith.constant 3 : index
    %c0_15 = arith.constant 0 : index
    %c0_16 = arith.constant 0 : index
    %30 = vector.load %arg2[%c3, %c0_15, %c0_16] : memref<4x128x128xbf16, #tpu.memory_space<vmem>>, vector<1x128x128xbf16>
    %31 = vector.shape_cast %30 : vector<1x128x128xbf16> to vector<128x128xbf16>
    %cst_17 = arith.constant dense<0.000000e+00> : vector<8x128xf32>
    %32 = tpu.matmul %29, %31, %cst_17 {dimension_numbers = #tpu.dot_dimension_numbers<[1], [0], [0], [1], [0, 0, 1, 1], [], []>} : vector<8x128xbf16>, vector<128x128xbf16>, vector<8x128xf32> -> vector<8x128xf32>
    %33 = vector.extract_strided_slice %0 {offsets = [3, 0], sizes = [1, 128], strides = [1, 1]} : vector<4x128xf32> to vector<1x128xf32>
    %34 = vector.broadcast %33 : vector<1x128xf32> to vector<8x128xf32>
    %35 = arith.addf %32, %34 : vector<8x128xf32>
    %c0_18 = arith.constant 0 : index
    %c0_19 = arith.constant 0 : index
    %36 = vector.load %arg4[%c0_18, %c0_19] : memref<8x128xf32, #tpu.memory_space<vmem>>, vector<8x128xf32>
    tpu.vector_store %arg4[%c0_18, %c0_19], %35 {strides = array<i32>} : memref<8x128xf32, #tpu.memory_space<vmem>>, vector<8x128xf32>,
    return
  }
  func.func @transform_0(%arg0: i32) -> (i32, i32) {
    %c0_i32 = arith.constant 0 : i32
    %c0_i32_0 = arith.constant 0 : i32
    return %arg0, %c0_i32 : i32, i32
  }
  func.func @transform_1(%arg0: i32) -> (i32, i32, i32) {
    %c0_i32 = arith.constant 0 : i32
    %c0_i32_0 = arith.constant 0 : i32
    %c0_i32_1 = arith.constant 0 : i32
    %c0_i32_2 = arith.constant 0 : i32
    return %c0_i32, %c0_i32_0, %c0_i32_1 : i32, i32, i32
  }
  func.func @transform_2(%arg0: i32) -> (i32, i32) {
    %c0_i32 = arith.constant 0 : i32
    %c0_i32_0 = arith.constant 0 : i32
    %c0_i32_1 = arith.constant 0 : i32
    return %c0_i32, %c0_i32_0 : i32, i32
  }
  func.func @transform_3(%arg0: i32) -> (i32, i32) {
    %c0_i32 = arith.constant 0 : i32
    %c0_i32_0 = arith.constant 0 : i32
    return %arg0, %c0_i32 : i32, i32
  }
}

</mosaic_0001>

<llo_original>
// kernel: tpu_custom_call.1
$region0: #{tpu_custom_call.1}
  #allocation0 [shape = 'u32[]', space=smem, size = 0x4, offset = 0x4, fixed_abs, tag = 'smem constant byte address 0x4 - core index']
  #allocation1 [shape = 'u32[144,128]{1,0:T(1,128)}', space=vmem, size = 0x12000, scoped, tag = 'internal scratch']
  %s0 = inlined_call_operand.hbm [shape: f32[8,128], index: 0, kind: input, shape index: {}]
  %s1 = inlined_call_operand.hbm [shape: bf16[4,128,128], index: 1, kind: input, shape index: {}]
  %s2 = inlined_call_operand.hbm [shape: f32[4,128], index: 2, kind: input, shape index: {}]
  %s3 = inlined_call_operand.hbm [shape: f32[8,128], index: 3, kind: output, shape index: {}]
  %s4 = sld [smem:[#allocation0]]
  $region34: #{tpu_custom_call.1} parent=0
    _
  %s6 = ssub.s32 1, %s4
  %s7 = scalar_select 0, %s6, %s4
  $region1: #{tpu_custom_call.1} parent=0
    #allocation2 [shape = 'u8[4096]{0}', space=vmem, size = 0x1000, scoped, tag = 'input window, operand 0, single buffered']
    #allocation3 [shape = 's32[1]{0}', space=sflag, size = 0x4, scoped, tag = 'scoped memory for tpu_custom_call.1']
    #allocation4 [shape = 's32[1]{0}', space=sflag, size = 0x4, scoped, tag = 'scoped memory for tpu_custom_call.1']
    #allocation5 [shape = 'u8[131072]{0}', space=vmem, size = 0x20000, scoped, tag = 'input window, operand 1, single buffered']
    #allocation6 [shape = 's32[1]{0}', space=sflag, size = 0x4, scoped, tag = 'scoped memory for tpu_custom_call.1']
    #allocation7 [shape = 'u8[2048]{0}', space=vmem, size = 0x800, scoped, tag = 'input window, operand 2, single buffered']
    #allocation8 [shape = 'u8[4096]{0}', space=vmem, size = 0x1000, scoped, tag = 'output window, operand 0, single buffered']
    %8 = vsyncpa [#allocation3], 0
    %9 = vsyncpa [#allocation6], 0
    %10 = vsyncpa [#allocation4], 0
    // Predicated region
    $region2: #{tpu_custom_call.1} parent=1 // pred_check
      _
    $region3: #{tpu_custom_call.1} parent=1 // pred_check_branch
      %12 = sbr.rel (0) target = $region5
    $region4: #{tpu_custom_call.1} parent=1 // pred_region
      %s14 = ssub.s32 128, 128
      %15 = vsyncadd [#allocation3], %s14
      %s17 = sshll.u32 [#allocation2], 4
      %s18 = int_to_ptr.vmem [resolvable:$true] %s17
      %20 = dma.hbm_to_vmem [thread:$0]  %s0, 128, %s18, [#allocation3]
    $region5: #{tpu_custom_call.1} parent=1 // pred_fallthru
      _
    // Predicated region
    $region6: #{tpu_custom_call.1} parent=1 // pred_check
      _
    $region7: #{tpu_custom_call.1} parent=1 // pred_check_branch
      %22 = sbr.rel (0) target = $region9
    $region8: #{tpu_custom_call.1} parent=1 // pred_region
      %s24 = ssub.s32 4096, 4096
      %25 = vsyncadd [#allocation6], %s24
      %s26 = sshll.u32 [#allocation5], 4
      %s27 = int_to_ptr.vmem [resolvable:$true] %s26
      %32 = dma.hbm_to_vmem [thread:$0]  %s1, 4096, %s27, [#allocation6], 64, 64, 4
    $region9: #{tpu_custom_call.1} parent=1 // pred_fallthru
      _
    // Predicated region
    $region10: #{tpu_custom_call.1} parent=1 // pred_check
      _
    $region11: #{tpu_custom_call.1} parent=1 // pred_check_branch
      %34 = sbr.rel (0) target = $region13
    $region12: #{tpu_custom_call.1} parent=1 // pred_region
      %s36 = ssub.s32 64, 64
      %37 = vsyncadd [#allocation6], %s36
      %s39 = sshll.u32 [#allocation7], 4
      %s40 = int_to_ptr.vmem [resolvable:$true] %s39
      %42 = dma.hbm_to_vmem [thread:$0]  %s2, 64, %s40, [#allocation6]
    $region13: #{tpu_custom_call.1} parent=1 // pred_fallthru
      _
    // Predicated region
    $region14: #{tpu_custom_call.1} parent=1 // pred_check
      _
    $region15: #{tpu_custom_call.1} parent=1 // pred_check_branch
      %44 = sbr.rel (0) target = $region17
    $region16: #{tpu_custom_call.1} parent=1 // pred_region
      %45 = dma.done [#allocation3], 128
    $region17: #{tpu_custom_call.1} parent=1 // pred_fallthru
      _
    // Predicated region
    $region18: #{tpu_custom_call.1} parent=1 // pred_check
      _
    $region19: #{tpu_custom_call.1} parent=1 // pred_check_branch
      %47 = sbr.rel (0) target = $region21
    $region20: #{tpu_custom_call.1} parent=1 // pred_region
      %48 = dma.done [#allocation6], 4096
    $region21: #{tpu_custom_call.1} parent=1 // pred_fallthru
      _
    // Predicated region
    $region22: #{tpu_custom_call.1} parent=1 // pred_check
      _
    $region23: #{tpu_custom_call.1} parent=1 // pred_check_branch
      %50 = sbr.rel (0) target = $region25
    $region24: #{tpu_custom_call.1} parent=1 // pred_region
      %51 = dma.done [#allocation6], 64
    $region25: #{tpu_custom_call.1} parent=1 // pred_fallthru
      _
    %v53 = vld [vmem:[#allocation7] sm:$0xf]
    %v54 = vld [vmem:[#allocation2] sm:$0xff]
    %v55 = vpack.c.bf16 %v54, %v54
    %v56 = vld [vmem:[#allocation5] sm:$0xf]
    %v57 = vld [vmem:[#allocation5 + $0x4] sm:$0xf]
    %v58 = vld [vmem:[#allocation5 + $0x8] sm:$0xf]
    %v59 = vld [vmem:[#allocation5 + $0xc] sm:$0xf]
    %v60 = vld [vmem:[#allocation5 + $0x10] sm:$0xf]
    %v61 = vld [vmem:[#allocation5 + $0x14] sm:$0xf]
    %v62 = vld [vmem:[#allocation5 + $0x18] sm:$0xf]
    %v63 = vld [vmem:[#allocation5 + $0x1c] sm:$0xf]
    %v64 = vld [vmem:[#allocation5 + $0x20] sm:$0xf]
    %v65 = vld [vmem:[#allocation5 + $0x24] sm:$0xf]
    %v66 = vld [vmem:[#allocation5 + $0x28] sm:$0xf]
    %v67 = vld [vmem:[#allocation5 + $0x2c] sm:$0xf]
    %v68 = vld [vmem:[#allocation5 + $0x30] sm:$0xf]
    %v69 = vld [vmem:[#allocation5 + $0x34] sm:$0xf]
    %v70 = vld [vmem:[#allocation5 + $0x38] sm:$0xf]
    %v71 = vld [vmem:[#allocation5 + $0x3c] sm:$0xf]
    %v72 = vlaneseq
    %v73 = vshrl.u32 %v72, 7
    %v74 = vsub.s32 0, %v73
    %v75 = vrot.slane %v53, %v74
    %v92 = vunpack.c.l.b16 %v56
    %v93 = vunpack.c.l.b16 %v57
    %v94 = vunpack.c.l.b16 %v58
    %v95 = vunpack.c.l.b16 %v59
    %v96 = vunpack.c.l.b16 %v60
    %v97 = vunpack.c.l.b16 %v61
    %v98 = vunpack.c.l.b16 %v62
    %v99 = vunpack.c.l.b16 %v63
    %v100 = vunpack.c.l.b16 %v64
    %v101 = vunpack.c.l.b16 %v65
    %v102 = vunpack.c.l.b16 %v66
    %v103 = vunpack.c.l.b16 %v67
    %v104 = vunpack.c.l.b16 %v68
    %v105 = vunpack.c.l.b16 %v69
    %v106 = vunpack.c.l.b16 %v70
    %v107 = vunpack.c.l.b16 %v71
    %v108 = vpack.c.b16 %v93, %v92
    %v109 = vpack.c.b16 %v95, %v94
    %v110 = vpack.c.b16 %v97, %v96
    %v111 = vpack.c.b16 %v99, %v98
    %v112 = vpack.c.b16 %v101, %v100
    %v113 = vpack.c.b16 %v103, %v102
    %v114 = vpack.c.b16 %v105, %v104
    %v115 = vpack.c.b16 %v107, %v106
    %124 = vmatprep.subr.bf16.mxu0 0
    %125 = vmatpush1.bf16.msra.mxu0 %v115
    %126 = vmatprep.subr.bf16.mxu0 0
    %127 = vmatpush1.bf16.msra.mxu0 %v114
    %128 = vmatprep.subr.bf16.mxu0 0
    %129 = vmatpush1.bf16.msra.mxu0 %v113
    %130 = vmatprep.subr.bf16.mxu0 0
    %131 = vmatpush1.bf16.msra.mxu0 %v112
    %132 = vmatprep.subr.bf16.mxu0 0
    %133 = vmatpush1.bf16.msra.mxu0 %v111
    %134 = vmatprep.subr.bf16.mxu0 0
    %135 = vmatpush1.bf16.msra.mxu0 %v110
    %136 = vmatprep.subr.bf16.mxu0 0
    %137 = vmatpush1.bf16.msra.mxu0 %v109
    %138 = vmatprep.subr.bf16.mxu0 0
    %139 = vmatpush1.bf16.msra.mxu0 %v108
    %140 = vmatprep.subr.bf16.mxu0 0
    %141 = vmatpush2.bf16.msra.mxu0 0
    %142 = vmatprep.subr.bf16.mxu0 0
    %143 = vmatpush2.bf16.msra.mxu0 0
    %144 = vmatprep.subr.bf16.mxu0 0
    %145 = vmatpush2.bf16.msra.mxu0 0
    %146 = vmatprep.subr.bf16.mxu0 0
    %147 = vmatpush2.bf16.msra.mxu0 0
    %148 = vmatprep.subr.bf16.mxu0 0
    %149 = vmatpush2.bf16.msra.mxu0 0
    %150 = vmatprep.subr.bf16.mxu0 0
    %151 = vmatpush2.bf16.msra.mxu0 0
    %152 = vmatprep.subr.bf16.mxu0 0
    %153 = vmatpush2.bf16.msra.mxu0 0
    %154 = vmatprep.subr.bf16.mxu0 0
    %155 = vmatpush2.bf16.msra.mxu0 0
    %156 = vmatprep.mubr.bf16.mxu0 0
    %157 = vmatmul.mubr.bf16.gmra.mxu0 %v55
    %v158 = vpop.f32.mrf.mxu0
    %v159 = vadd.f32 %v75, %v158
    %v160 = vpop.f32.mrf.mxu0
    %v161 = vpop.f32.mrf.mxu0
    %v162 = vpop.f32.mrf.mxu0
    %163 = vdwg.mxu0
    %v164 = vmax.f32 %v159, 0.0
    %v165 = vpack.c.bf16 %v164, %v164
    %s166 = scalar_lea.vmem [#allocation5], 64
    %v167 = vld [vmem:[%s166] sm:$0xf]
    %v168 = vld [vmem:[%s166 + $0x4] sm:$0xf]
    %v169 = vld [vmem:[%s166 + $0x8] sm:$0xf]
    %v170 = vld [vmem:[%s166 + $0xc] sm:$0xf]
    %v171 = vld [vmem:[%s166 + $0x10] sm:$0xf]
    %v172 = vld [vmem:[%s166 + $0x14] sm:$0xf]
    %v173 = vld [vmem:[%s166 + $0x18] sm:$0xf]
    %v174 = vld [vmem:[%s166 + $0x1c] sm:$0xf]
    %v175 = vld [vmem:[%s166 + $0x20] sm:$0xf]
    %v176 = vld [vmem:[%s166 + $0x24] sm:$0xf]
    %v177 = vld [vmem:[%s166 + $0x28] sm:$0xf]
    %v178 = vld [vmem:[%s166 + $0x2c] sm:$0xf]
    %v179 = vld [vmem:[%s166 + $0x30] sm:$0xf]
    %v180 = vld [vmem:[%s166 + $0x34] sm:$0xf]
    %v181 = vld [vmem:[%s166 + $0x38] sm:$0xf]
    %v182 = vld [vmem:[%s166 + $0x3c] sm:$0xf]
    %v183 = vlaneseq
    %v184 = vshrl.u32 %v183, 7
    %v185 = vsub.s32 1, %v184
    %v186 = vrot.slane %v53, %v185
    %v203 = vunpack.c.l.b16 %v167
    %v204 = vunpack.c.l.b16 %v168
    %v205 = vunpack.c.l.b16 %v169
    %v206 = vunpack.c.l.b16 %v170
    %v207 = vunpack.c.l.b16 %v171
    %v208 = vunpack.c.l.b16 %v172
    %v209 = vunpack.c.l.b16 %v173
    %v210 = vunpack.c.l.b16 %v174
    %v211 = vunpack.c.l.b16 %v175
    %v212 = vunpack.c.l.b16 %v176
    %v213 = vunpack.c.l.b16 %v177
    %v214 = vunpack.c.l.b16 %v178
    %v215 = vunpack.c.l.b16 %v179
    %v216 = vunpack.c.l.b16 %v180
    %v217 = vunpack.c.l.b16 %v181
    %v218 = vunpack.c.l.b16 %v182
    %v219 = vpack.c.b16 %v204, %v203
    %v220 = vpack.c.b16 %v206, %v205
    %v221 = vpack.c.b16 %v208, %v207
    %v222 = vpack.c.b16 %v210, %v209
    %v223 = vpack.c.b16 %v212, %v211
    %v224 = vpack.c.b16 %v214, %v213
    %v225 = vpack.c.b16 %v216, %v215
    %v226 = vpack.c.b16 %v218, %v217
    %235 = vmatprep.subr.bf16.mxu0 0
    %236 = vmatpush1.bf16.msra.mxu0 %v226
    %237 = vmatprep.subr.bf16.mxu0 0
    %238 = vmatpush1.bf16.msra.mxu0 %v225
    %239 = vmatprep.subr.bf16.mxu0 0
    %240 = vmatpush1.bf16.msra.mxu0 %v224
    %241 = vmatprep.subr.bf16.mxu0 0
    %242 = vmatpush1.bf16.msra.mxu0 %v223
    %243 = vmatprep.subr.bf16.mxu0 0
    %244 = vmatpush1.bf16.msra.mxu0 %v222
    %245 = vmatprep.subr.bf16.mxu0 0
    %246 = vmatpush1.bf16.msra.mxu0 %v221
    %247 = vmatprep.subr.bf16.mxu0 0
    %248 = vmatpush1.bf16.msra.mxu0 %v220
    %249 = vmatprep.subr.bf16.mxu0 0
    %250 = vmatpush1.bf16.msra.mxu0 %v219
    %251 = vmatprep.subr.bf16.mxu0 0
    %252 = vmatpush2.bf16.msra.mxu0 0
    %253 = vmatprep.subr.bf16.mxu0 0
    %254 = vmatpush2.bf16.msra.mxu0 0
    %255 = vmatprep.subr.bf16.mxu0 0
    %256 = vmatpush2.bf16.msra.mxu0 0
    %257 = vmatprep.subr.bf16.mxu0 0
    %258 = vmatpush2.bf16.msra.mxu0 0
    %259 = vmatprep.subr.bf16.mxu0 0
    %260 = vmatpush2.bf16.msra.mxu0 0
    %261 = vmatprep.subr.bf16.mxu0 0
    %262 = vmatpush2.bf16.msra.mxu0 0
    %263 = vmatprep.subr.bf16.mxu0 0
    %264 = vmatpush2.bf16.msra.mxu0 0
    %265 = vmatprep.subr.bf16.mxu0 0
    %266 = vmatpush2.bf16.msra.mxu0 0
    %267 = vmatprep.mubr.bf16.mxu0 0
    %268 = vmatmul.mubr.bf16.gmra.mxu0 %v165
    %v269 = vpop.f32.mrf.mxu0
    %v270 = vadd.f32 %v186, %v269
    %v271 = vpop.f32.mrf.mxu0
    %v272 = vpop.f32.mrf.mxu0
    %v273 = vpop.f32.mrf.mxu0
    %274 = vdwg.mxu0
    %v275 = vmax.f32 %v270, 0.0
    %v276 = vpack.c.bf16 %v275, %v275
    %s277 = scalar_lea.vmem [#allocation5], 128
    %v278 = vld [vmem:[%s277] sm:$0xf]
    %v279 = vld [vmem:[%s277 + $0x4] sm:$0xf]
    %v280 = vld [vmem:[%s277 + $0x8] sm:$0xf]
    %v281 = vld [vmem:[%s277 + $0xc] sm:$0xf]
    %v282 = vld [vmem:[%s277 + $0x10] sm:$0xf]
    %v283 = vld [vmem:[%s277 + $0x14] sm:$0xf]
    %v284 = vld [vmem:[%s277 + $0x18] sm:$0xf]
    %v285 = vld [vmem:[%s277 + $0x1c] sm:$0xf]
    %v286 = vld [vmem:[%s277 + $0x20] sm:$0xf]
    %v287 = vld [vmem:[%s277 + $0x24] sm:$0xf]
    %v288 = vld [vmem:[%s277 + $0x28] sm:$0xf]
    %v289 = vld [vmem:[%s277 + $0x2c] sm:$0xf]
    %v290 = vld [vmem:[%s277 + $0x30] sm:$0xf]
    %v291 = vld [vmem:[%s277 + $0x34] sm:$0xf]
    %v292 = vld [vmem:[%s277 + $0x38] sm:$0xf]
    %v293 = vld [vmem:[%s277 + $0x3c] sm:$0xf]
    %v294 = vlaneseq
    %v295 = vshrl.u32 %v294, 7
    %v296 = vsub.s32 2, %v295
    %v297 = vrot.slane %v53, %v296
    %v314 = vunpack.c.l.b16 %v278
    %v315 = vunpack.c.l.b16 %v279
    %v316 = vunpack.c.l.b16 %v280
    %v317 = vunpack.c.l.b16 %v281
    %v318 = vunpack.c.l.b16 %v282
    %v319 = vunpack.c.l.b16 %v283
    %v320 = vunpack.c.l.b16 %v284
    %v321 = vunpack.c.l.b16 %v285
    %v322 = vunpack.c.l.b16 %v286
    %v323 = vunpack.c.l.b16 %v287
    %v324 = vunpack.c.l.b16 %v288
    %v325 = vunpack.c.l.b16 %v289
    %v326 = vunpack.c.l.b16 %v290
    %v327 = vunpack.c.l.b16 %v291
    %v328 = vunpack.c.l.b16 %v292
    %v329 = vunpack.c.l.b16 %v293
    %v330 = vpack.c.b16 %v315, %v314
    %v331 = vpack.c.b16 %v317, %v316
    %v332 = vpack.c.b16 %v319, %v318
    %v333 = vpack.c.b16 %v321, %v320
    %v334 = vpack.c.b16 %v323, %v322
    %v335 = vpack.c.b16 %v325, %v324
    %v336 = vpack.c.b16 %v327, %v326
    %v337 = vpack.c.b16 %v329, %v328
    %346 = vmatprep.subr.bf16.mxu0 0
    %347 = vmatpush1.bf16.msra.mxu0 %v337
    %348 = vmatprep.subr.bf16.mxu0 0
    %349 = vmatpush1.bf16.msra.mxu0 %v336
    %350 = vmatprep.subr.bf16.mxu0 0
    %351 = vmatpush1.bf16.msra.mxu0 %v335
    %352 = vmatprep.subr.bf16.mxu0 0
    %353 = vmatpush1.bf16.msra.mxu0 %v334
    %354 = vmatprep.subr.bf16.mxu0 0
    %355 = vmatpush1.bf16.msra.mxu0 %v333
    %356 = vmatprep.subr.bf16.mxu0 0
    %357 = vmatpush1.bf16.msra.mxu0 %v332
    %358 = vmatprep.subr.bf16.mxu0 0
    %359 = vmatpush1.bf16.msra.mxu0 %v331
    %360 = vmatprep.subr.bf16.mxu0 0
    %361 = vmatpush1.bf16.msra.mxu0 %v330
    %362 = vmatprep.subr.bf16.mxu0 0
    %363 = vmatpush2.bf16.msra.mxu0 0
    %364 = vmatprep.subr.bf16.mxu0 0
    %365 = vmatpush2.bf16.msra.mxu0 0
    %366 = vmatprep.subr.bf16.mxu0 0
    %367 = vmatpush2.bf16.msra.mxu0 0
    %368 = vmatprep.subr.bf16.mxu0 0
    %369 = vmatpush2.bf16.msra.mxu0 0
    %370 = vmatprep.subr.bf16.mxu0 0
    %371 = vmatpush2.bf16.msra.mxu0 0
    %372 = vmatprep.subr.bf16.mxu0 0
    %373 = vmatpush2.bf16.msra.mxu0 0
    %374 = vmatprep.subr.bf16.mxu0 0
    %375 = vmatpush2.bf16.msra.mxu0 0
    %376 = vmatprep.subr.bf16.mxu0 0
    %377 = vmatpush2.bf16.msra.mxu0 0
    %378 = vmatprep.mubr.bf16.mxu0 0
    %379 = vmatmul.mubr.bf16.gmra.mxu0 %v276
    %v380 = vpop.f32.mrf.mxu0
    %v381 = vadd.f32 %v297, %v380
    %v382 = vpop.f32.mrf.mxu0
    %v383 = vpop.f32.mrf.mxu0
    %v384 = vpop.f32.mrf.mxu0
    %385 = vdwg.mxu0
    %v386 = vmax.f32 %v381, 0.0
    %v387 = vpack.c.bf16 %v386, %v386
    %s388 = scalar_lea.vmem [#allocation5], 192
    %v389 = vld [vmem:[%s388] sm:$0xf]
    %v390 = vld [vmem:[%s388 + $0x4] sm:$0xf]
    %v391 = vld [vmem:[%s388 + $0x8] sm:$0xf]
    %v392 = vld [vmem:[%s388 + $0xc] sm:$0xf]
    %v393 = vld [vmem:[%s388 + $0x10] sm:$0xf]
    %v394 = vld [vmem:[%s388 + $0x14] sm:$0xf]
    %v395 = vld [vmem:[%s388 + $0x18] sm:$0xf]
    %v396 = vld [vmem:[%s388 + $0x1c] sm:$0xf]
    %v397 = vld [vmem:[%s388 + $0x20] sm:$0xf]
    %v398 = vld [vmem:[%s388 + $0x24] sm:$0xf]
    %v399 = vld [vmem:[%s388 + $0x28] sm:$0xf]
    %v400 = vld [vmem:[%s388 + $0x2c] sm:$0xf]
    %v401 = vld [vmem:[%s388 + $0x30] sm:$0xf]
    %v402 = vld [vmem:[%s388 + $0x34] sm:$0xf]
    %v403 = vld [vmem:[%s388 + $0x38] sm:$0xf]
    %v404 = vld [vmem:[%s388 + $0x3c] sm:$0xf]
    %v405 = vlaneseq
    %v406 = vshrl.u32 %v405, 7
    %v407 = vsub.s32 3, %v406
    %v408 = vrot.slane %v53, %v407
    %v425 = vunpack.c.l.b16 %v389
    %v426 = vunpack.c.l.b16 %v390
    %v427 = vunpack.c.l.b16 %v391
    %v428 = vunpack.c.l.b16 %v392
    %v429 = vunpack.c.l.b16 %v393
    %v430 = vunpack.c.l.b16 %v394
    %v431 = vunpack.c.l.b16 %v395
    %v432 = vunpack.c.l.b16 %v396
    %v433 = vunpack.c.l.b16 %v397
    %v434 = vunpack.c.l.b16 %v398
    %v435 = vunpack.c.l.b16 %v399
    %v436 = vunpack.c.l.b16 %v400
    %v437 = vunpack.c.l.b16 %v401
    %v438 = vunpack.c.l.b16 %v402
    %v439 = vunpack.c.l.b16 %v403
    %v440 = vunpack.c.l.b16 %v404
    %v441 = vpack.c.b16 %v426, %v425
    %v442 = vpack.c.b16 %v428, %v427
    %v443 = vpack.c.b16 %v430, %v429
    %v444 = vpack.c.b16 %v432, %v431
    %v445 = vpack.c.b16 %v434, %v433
    %v446 = vpack.c.b16 %v436, %v435
    %v447 = vpack.c.b16 %v438, %v437
    %v448 = vpack.c.b16 %v440, %v439
    %457 = vmatprep.subr.bf16.mxu0 0
    %458 = vmatpush1.bf16.msra.mxu0 %v448
    %459 = vmatprep.subr.bf16.mxu0 0
    %460 = vmatpush1.bf16.msra.mxu0 %v447
    %461 = vmatprep.subr.bf16.mxu0 0
    %462 = vmatpush1.bf16.msra.mxu0 %v446
    %463 = vmatprep.subr.bf16.mxu0 0
    %464 = vmatpush1.bf16.msra.mxu0 %v445
    %465 = vmatprep.subr.bf16.mxu0 0
    %466 = vmatpush1.bf16.msra.mxu0 %v444
    %467 = vmatprep.subr.bf16.mxu0 0
    %468 = vmatpush1.bf16.msra.mxu0 %v443
    %469 = vmatprep.subr.bf16.mxu0 0
    %470 = vmatpush1.bf16.msra.mxu0 %v442
    %471 = vmatprep.subr.bf16.mxu0 0
    %472 = vmatpush1.bf16.msra.mxu0 %v441
    %473 = vmatprep.subr.bf16.mxu0 0
    %474 = vmatpush2.bf16.msra.mxu0 0
    %475 = vmatprep.subr.bf16.mxu0 0
    %476 = vmatpush2.bf16.msra.mxu0 0
    %477 = vmatprep.subr.bf16.mxu0 0
    %478 = vmatpush2.bf16.msra.mxu0 0
    %479 = vmatprep.subr.bf16.mxu0 0
    %480 = vmatpush2.bf16.msra.mxu0 0
    %481 = vmatprep.subr.bf16.mxu0 0
    %482 = vmatpush2.bf16.msra.mxu0 0
    %483 = vmatprep.subr.bf16.mxu0 0
    %484 = vmatpush2.bf16.msra.mxu0 0
    %485 = vmatprep.subr.bf16.mxu0 0
    %486 = vmatpush2.bf16.msra.mxu0 0
    %487 = vmatprep.subr.bf16.mxu0 0
    %488 = vmatpush2.bf16.msra.mxu0 0
    %489 = vmatprep.mubr.bf16.mxu0 0
    %490 = vmatmul.mubr.bf16.gmra.mxu0 %v387
    %v491 = vpop.f32.mrf.mxu0
    %v492 = vadd.f32 %v408, %v491
    %v493 = vpop.f32.mrf.mxu0
    %v494 = vpop.f32.mrf.mxu0
    %v495 = vpop.f32.mrf.mxu0
    %496 = vdwg.mxu0
    %497 = vst [vmem:[#allocation8] sm:$0xff] %v492
    // Predicated region
    $region26: #{tpu_custom_call.1} parent=1 // pred_check
      _
    $region27: #{tpu_custom_call.1} parent=1 // pred_check_branch
      %499 = sbr.rel (0) target = $region29
    $region28: #{tpu_custom_call.1} parent=1 // pred_region
      %s501 = ssub.s32 128, 128
      %502 = vsyncadd [#allocation4], %s501
      %s504 = sshll.u32 [#allocation8], 4
      %s505 = int_to_ptr.vmem [resolvable:$true] %s504
      %507 = dma.vmem_to_hbm [thread:$0]  %s505, 128, %s3, [#allocation4]
    $region29: #{tpu_custom_call.1} parent=1 // pred_fallthru
      _
    // Predicated region
    $region30: #{tpu_custom_call.1} parent=1 // pred_check
      _
    $region31: #{tpu_custom_call.1} parent=1 // pred_check_branch
      %509 = sbr.rel (0) target = $region33
    $region32: #{tpu_custom_call.1} parent=1 // pred_region
      %510 = dma.done [#allocation4], 128
    $region33: #{tpu_custom_call.1} parent=1 // pred_fallthru
      _
    %511 = vsyncpa [#allocation3], 1
    %512 = vsyncpa [#allocation6], 1
    %513 = vsyncpa [#allocation4], 1

</llo_original>
